<compile_context>
chip_gen: v7x
topology: tpu7x:2x2x1
jax: 0.10.0
libtpu: 0.0.40
codegen_flags: <defaults>
</compile_context>

<pallas_src>
import functools

import jax
import jax.numpy as jnp
from jax import lax
from jax.experimental import pallas as pl
from jax.experimental.pallas import tpu as pltpu


# ---------------------------------------------------------------------------
# Fused Pallas kernel
# ---------------------------------------------------------------------------

def _fused_gnn_kernel(s_ref, emb_ref, a0_ref, a1_ref, w1_ref, w2_ref, b_ref, o_ref,
                      *, inv_num_fields, num_classes):
    bf16 = jnp.bfloat16
    f32 = jnp.float32
    d_pad = w1_ref.shape[1]
    c_pad = w2_ref.shape[1]

    # Embedding gather + mean over fields folded into one matmul:
    #   X0[n, :] = (1/F) * sum_f E[field_index[n_id[n], f], :]  ==  (S_counts @ E) / F
    x0 = jnp.dot(s_ref[...], emb_ref[...], preferred_element_type=f32)
    x0 = x0 * inv_num_fields  # exact-count normalization done in f32

    # SAGE layer 1 (mean aggregation; root/lin_r term skipped since x_dst is None):
    #   H1 = relu((A0 @ X0) @ W1 + b1)
    agg1 = jnp.dot(a0_ref[...], x0.astype(bf16), preferred_element_type=f32)
    h1 = jnp.dot(agg1.astype(bf16), w1_ref[...], preferred_element_type=f32)
    h1 = jnp.maximum(h1 + b_ref[0:1, :d_pad], 0.0)
    # TODO(synk): F.dropout(p=args.dropout) is training-mode only; eval => identity.

    # SAGE layer 2, reassociated as A1 @ (H1 @ W2) because num_classes << field_dim.
    hw2 = jnp.dot(h1.astype(bf16), w2_ref[...], preferred_element_type=f32)
    out = jnp.dot(a1_ref[...], hw2.astype(bf16), preferred_element_type=f32)
    out = out + b_ref[1:2, :c_pad]

    # log_softmax over the real (unpadded) class lanes only.
    lane = lax.broadcasted_iota(jnp.int32, out.shape, 1)
    masked = jnp.where(lane < num_classes, out, -1e30)
    m = jnp.max(masked, axis=-1, keepdims=True)
    shifted = masked - m
    lse = jnp.log(jnp.sum(jnp.exp(shifted), axis=-1, keepdims=True))
    o_ref[...] = (shifted - lse).astype(o_ref.dtype)


def _full_spec(shape):
    """BlockSpec covering the whole (small, padded) array in one VMEM block."""
    nd = len(shape)
    return pl.BlockSpec(shape, lambda i, _nd=nd: (0,) * _nd)


def _fused_gnn_call(s_cnt, emb, a0, a1, w1, w2, b_all, *, num_fields, num_classes):
    n_out = a1.shape[0]
    c_pad = w2.shape[1]
    kern = functools.partial(_fused_gnn_kernel,
                             inv_num_fields=1.0 / num_fields,
                             num_classes=num_classes)
    return pl.pallas_call(
        kern,
        grid=(1,),
        in_specs=[_full_spec(x.shape) for x in (s_cnt, emb, a0, a1, w1, w2, b_all)],
        out_specs=_full_spec((n_out, c_pad)),
        out_shape=jax.ShapeDtypeStruct((n_out, c_pad), jnp.float32),
        compiler_params=pltpu.CompilerParams(dimension_semantics=("arbitrary",)),
    )(s_cnt, emb, a0, a1, w1, w2, b_all)


# ---------------------------------------------------------------------------
# Plain-JAX glue (index preparation: scatters / padding / dtype casts)
# ---------------------------------------------------------------------------

def _round_up(x, m):
    return (x + m - 1) // m * m


def _pad_to(x, shape):
    return jnp.pad(x, [(0, t - s) for s, t in zip(x.shape, shape)])


def _field_count_matrix(field_index, n_id, n_pad, fc_pad):
    """S[i, c] = #{f : field_index[n_id[i], f] == c} (exact integer counts)."""
    fi = field_index[n_id]                                    # [n, F]
    n, num_fields = fi.shape
    rows = jnp.repeat(jnp.arange(n), num_fields)
    cols = fi.reshape(-1)
    s = jnp.zeros((n_pad, fc_pad), jnp.float32).at[rows, cols].add(1.0)
    return s.astype(jnp.bfloat16)                             # small ints: exact in bf16


def _mean_adj(edge_index, n_dst_pad, n_src_pad):
    """Dense row-normalized adjacency (zero-padded) so A @ X == scatter-mean."""
    src, dst = edge_index[0], edge_index[1]
    cnt = jnp.zeros((n_dst_pad, n_src_pad), jnp.float32).at[dst, src].add(1.0)
    deg = jnp.sum(cnt, axis=1, keepdims=True)
    return (cnt / jnp.maximum(deg, 1.0)).astype(jnp.bfloat16)


def stacked_gnn_forward(params, field_index, data_flow, *, num_classes):
    emb = params["embedding"]
    field_count, field_dim = emb.shape
    num_fields = field_index.shape[1]

    blk0, blk1 = data_flow
    n0_src, n0_dst = blk0["size"]
    n1_src, n1_dst = blk1["size"]

    # Padded (lane/sublane-dense) sizes: features -> x128 lanes, nodes -> x16 sublanes.
    n0s_p = _round_up(n0_src, 16)
    n0d_p = _round_up(max(n0_dst, n1_src), 16)  # layer-1 dst rows are layer-2 src rows
    n1d_p = _round_up(n1_dst, 16)
    fc_p = _round_up(field_count, 128)
    d_p = _round_up(field_dim, 128)
    c_p = _round_up(num_classes, 128)

    # Scatter / gather index prep (glue).
    s_cnt = _field_count_matrix(field_index, blk0["n_id"], n0s_p, fc_p)
    a0 = _mean_adj(blk0["edge_index"], n0d_p, n0s_p)
    a1 = _mean_adj(blk1["edge_index"], n1d_p, n0d_p)

    emb_p = _pad_to(emb, (fc_p, d_p)).astype(jnp.bfloat16)
    w1_p = _pad_to(params["w1"], (d_p, d_p)).astype(jnp.bfloat16)
    w2_p = _pad_to(params["w2"], (d_p, c_p)).astype(jnp.bfloat16)

    # Both biases packed into one aligned (8, 128) f32 block (row 0 = b1, row 1 = b2).
    b_all = jnp.zeros((8, max(d_p, c_p)), jnp.float32)
    b_all = b_all.at[0, :field_dim].set(params["b1"])
    b_all = b_all.at[1, :num_classes].set(params["b2"])

    out = _fused_gnn_call(s_cnt, emb_p, a0, a1, w1_p, w2_p, b_all,
                          num_fields=num_fields, num_classes=num_classes)
    return out[:n1_dst, :num_classes]


# ---------------------------------------------------------------------------
# Pure-JAX f32 reference (for correctness check)
# ---------------------------------------------------------------------------

def _reference_forward(params, field_index, data_flow):
    user = jnp.mean(params["embedding"][field_index], axis=-2)
    blk0, blk1 = data_flow

    def mean_agg(edge_index, size, x):
        n_src, n_dst = size
        src, dst = edge_index[0], edge_index[1]
        a = jnp.zeros((n_dst, n_src), jnp.float32).at[dst, src].add(1.0)
        deg = jnp.sum(a, axis=1, keepdims=True)
        return (a / jnp.maximum(deg, 1.0)) @ x

    x = user[blk0["n_id"]]
    h = mean_agg(blk0["edge_index"], blk0["size"], x) @ params["w1"] + params["b1"]
    h = jnp.maximum(h, 0.0)
    o = mean_agg(blk1["edge_index"], blk1["size"], h) @ params["w2"] + params["b2"]
    return jax.nn.log_softmax(o, axis=1)


# ---------------------------------------------------------------------------
# Main
# ---------------------------------------------------------------------------

if __name__ == "__main__":
    key = jax.random.PRNGKey(0)
    ks = jax.random.split(key, 10)

    field_count = 20
    field_dim = 64
    output_channels = 8
    num_users = 16
    num_fields = 5

    # Deterministic parameter init (shapes follow the module __init__).
    params = {
        "embedding": 0.1 * jax.random.normal(ks[0], (field_count, field_dim), jnp.float32),
        "w1": 0.1 * jax.random.normal(ks[1], (field_dim, field_dim), jnp.float32),
        "b1": 0.1 * jax.random.normal(ks[2], (field_dim,), jnp.float32),
        "w2": 0.1 * jax.random.normal(ks[3], (field_dim, output_channels), jnp.float32),
        "b2": 0.1 * jax.random.normal(ks[4], (output_channels,), jnp.float32),
    }

    field_index = jax.random.randint(ks[5], (num_users, num_fields), 0, field_count)

    # Synthetic NeighborSampler data_flow: block0 12 src -> 8 dst, block1 8 src -> 4 dst.
    n0_src, n0_dst = 12, 8
    n1_src, n1_dst = 8, 4
    e0, e1 = 24, 12
    data_flow = [
        {
            "n_id": jnp.arange(n0_src),
            "edge_index": jnp.stack([
                jax.random.randint(ks[6], (e0,), 0, n0_src),
                jax.random.randint(ks[7], (e0,), 0, n0_dst),
            ]),
            "size": (n0_src, n0_dst),
        },
        {
            "edge_index": jnp.stack([
                jax.random.randint(ks[8], (e1,), 0, n1_src),
                jax.random.randint(ks[9], (e1,), 0, n1_dst),
            ]),
            "size": (n1_src, n1_dst),
        },
    ]

    scores = stacked_gnn_forward(params, field_index, data_flow,
                                 num_classes=output_channels)
    scores = jax.block_until_ready(scores)

    assert scores.shape == (n1_dst, output_channels)
    assert bool(jnp.all(jnp.isfinite(scores)))
    # log_softmax rows should exponentiate-sum to ~1
    assert bool(jnp.allclose(jnp.sum(jnp.exp(scores), axis=1), 1.0, atol=1e-4))

    # Cross-check against the f32 pure-JAX reference (bf16 matmuls -> loose tol).
    ref = _reference_forward(params, field_index, data_flow)
    assert bool(jnp.allclose(scores, ref, atol=5e-2)), \
        f"max |diff| = {float(jnp.max(jnp.abs(scores - ref)))}"

    print("KERNEL_OK")
</pallas_src>

<mosaic_0001>
module attributes {stable_mosaic.version = 11 : i64} {
  func.func @_fused_gnn_kernel(%arg0: i32, %arg1: memref<16x128xbf16, #tpu.memory_space<vmem>>, %arg2: memref<128x128xbf16, #tpu.memory_space<vmem>>, %arg3: memref<16x16xbf16, #tpu.memory_space<vmem>>, %arg4: memref<16x16xbf16, #tpu.memory_space<vmem>>, %arg5: memref<128x128xbf16, #tpu.memory_space<vmem>>, %arg6: memref<128x128xbf16, #tpu.memory_space<vmem>>, %arg7: memref<8x128xf32, #tpu.memory_space<vmem>>, %arg8: memref<16x128xf32, #tpu.memory_space<vmem>>) attributes {dimension_semantics = [#tpu.dimension_semantics<arbitrary>], iteration_bounds = array<i64: 1>, scalar_prefetch = 0 : i64, scratch_operands = 0 : i64, tpu.core_type = #tpu.core_type<tc>, window_params = [{pipeline_mode = #tpu.pipeline_mode<synchronous>, transform_indices = @transform_0, window_bounds = array<i64: 16, 128>}, {pipeline_mode = #tpu.pipeline_mode<synchronous>, transform_indices = @transform_1, window_bounds = array<i64: 128, 128>}, {pipeline_mode = #tpu.pipeline_mode<synchronous>, transform_indices = @transform_2, window_bounds = array<i64: 16, 16>}, {pipeline_mode = #tpu.pipeline_mode<synchronous>, transform_indices = @transform_3, window_bounds = array<i64: 16, 16>}, {pipeline_mode = #tpu.pipeline_mode<synchronous>, transform_indices = @transform_4, window_bounds = array<i64: 128, 128>}, {pipeline_mode = #tpu.pipeline_mode<synchronous>, transform_indices = @transform_5, window_bounds = array<i64: 128, 128>}, {pipeline_mode = #tpu.pipeline_mode<synchronous>, transform_indices = @transform_6, window_bounds = array<i64: 8, 128>}, {pipeline_mode = #tpu.pipeline_mode<synchronous>, transform_indices = @transform_7, window_bounds = array<i64: 16, 128>}]} {
    %c0 = arith.constant 0 : index
    %c0_0 = arith.constant 0 : index
    %0 = vector.load %arg1[%c0, %c0_0] : memref<16x128xbf16, #tpu.memory_space<vmem>>, vector<16x128xbf16>
    %c0_1 = arith.constant 0 : index
    %c0_2 = arith.constant 0 : index
    %1 = vector.load %arg2[%c0_1, %c0_2] : memref<128x128xbf16, #tpu.memory_space<vmem>>, vector<128x128xbf16>
    %cst = arith.constant dense<0.000000e+00> : vector<16x128xf32>
    %2 = tpu.matmul %0, %1, %cst {dimension_numbers = #tpu.dot_dimension_numbers<[1], [0], [0], [1], [0, 0, 1, 1], [], []>} : vector<16x128xbf16>, vector<128x128xbf16>, vector<16x128xf32> -> vector<16x128xf32>
    %cst_3 = arith.constant 2.000000e-01 : f32
    %3 = vector.broadcast %cst_3 : f32 to vector<16x128xf32>
    %4 = arith.mulf %2, %3 : vector<16x128xf32>
    %c0_4 = arith.constant 0 : index
    %c0_5 = arith.constant 0 : index
    %5 = vector.load %arg3[%c0_4, %c0_5] : memref<16x16xbf16, #tpu.memory_space<vmem>>, vector<16x16xbf16>
    %6 = arith.truncf %4 : vector<16x128xf32> to vector<16x128xbf16>
    %cst_6 = arith.constant dense<0.000000e+00> : vector<16x128xf32>
    %7 = tpu.matmul %5, %6, %cst_6 {dimension_numbers = #tpu.dot_dimension_numbers<[1], [0], [0], [1], [0, 0, 1, 1], [], []>} : vector<16x16xbf16>, vector<16x128xbf16>, vector<16x128xf32> -> vector<16x128xf32>
    %8 = arith.truncf %7 : vector<16x128xf32> to vector<16x128xbf16>
    %c0_7 = arith.constant 0 : index
    %c0_8 = arith.constant 0 : index
    %9 = vector.load %arg5[%c0_7, %c0_8] : memref<128x128xbf16, #tpu.memory_space<vmem>>, vector<128x128xbf16>
    %cst_9 = arith.constant dense<0.000000e+00> : vector<16x128xf32>
    %10 = tpu.matmul %8, %9, %cst_9 {dimension_numbers = #tpu.dot_dimension_numbers<[1], [0], [0], [1], [0, 0, 1, 1], [], []>} : vector<16x128xbf16>, vector<128x128xbf16>, vector<16x128xf32> -> vector<16x128xf32>
    %c0_10 = arith.constant 0 : index
    %c0_11 = arith.constant 0 : index
    %11 = vector.load %arg7[%c0_10, %c0_11] : memref<8x128xf32, #tpu.memory_space<vmem>>, vector<1x128xf32>
    %12 = vector.broadcast %11 : vector<1x128xf32> to vector<16x128xf32>
    %13 = arith.addf %10, %12 : vector<16x128xf32>
    %cst_12 = arith.constant 0.000000e+00 : f32
    %14 = vector.broadcast %cst_12 : f32 to vector<16x128xf32>
    %15 = arith.maximumf %13, %14 : vector<16x128xf32>
    %16 = arith.truncf %15 : vector<16x128xf32> to vector<16x128xbf16>
    %c0_13 = arith.constant 0 : index
    %c0_14 = arith.constant 0 : index
    %17 = vector.load %arg6[%c0_13, %c0_14] : memref<128x128xbf16, #tpu.memory_space<vmem>>, vector<128x128xbf16>
    %cst_15 = arith.constant dense<0.000000e+00> : vector<16x128xf32>
    %18 = tpu.matmul %16, %17, %cst_15 {dimension_numbers = #tpu.dot_dimension_numbers<[1], [0], [0], [1], [0, 0, 1, 1], [], []>} : vector<16x128xbf16>, vector<128x128xbf16>, vector<16x128xf32> -> vector<16x128xf32>
    %c0_16 = arith.constant 0 : index
    %c0_17 = arith.constant 0 : index
    %19 = vector.load %arg4[%c0_16, %c0_17] : memref<16x16xbf16, #tpu.memory_space<vmem>>, vector<16x16xbf16>
    %20 = arith.truncf %18 : vector<16x128xf32> to vector<16x128xbf16>
    %cst_18 = arith.constant dense<0.000000e+00> : vector<16x128xf32>
    %21 = tpu.matmul %19, %20, %cst_18 {dimension_numbers = #tpu.dot_dimension_numbers<[1], [0], [0], [1], [0, 0, 1, 1], [], []>} : vector<16x16xbf16>, vector<16x128xbf16>, vector<16x128xf32> -> vector<16x128xf32>
    %c1 = arith.constant 1 : index
    %c0_19 = arith.constant 0 : index
    %22 = vector.load %arg7[%c1, %c0_19] : memref<8x128xf32, #tpu.memory_space<vmem>>, vector<1x128xf32>
    %23 = vector.broadcast %22 : vector<1x128xf32> to vector<16x128xf32>
    %24 = arith.addf %21, %23 : vector<16x128xf32>
    %25 = tpu.iota {dimensions = array<i32: 1>} : vector<16x128xi32>
    %c8_i32 = arith.constant 8 : i32
    %26 = vector.broadcast %c8_i32 : i32 to vector<16x128xi32>
    %27 = arith.cmpi slt, %25, %26 : vector<16x128xi32>
    %cst_20 = arith.constant -1.000000e+30 : f32
    %28 = vector.broadcast %cst_20 : f32 to vector<16x128xf32>
    %29 = arith.select %27, %24, %28 : vector<16x128xi1>, vector<16x128xf32>
    %cst_21 = arith.constant dense<0xFF800000> : vector<16xf32>
    %30 = vector.multi_reduction <maximumf>, %29, %cst_21 [1] : vector<16x128xf32> to vector<16xf32>
    %31 = vector.shape_cast %30 : vector<16xf32> to vector<16x1xf32>
    %32 = vector.broadcast %31 : vector<16x1xf32> to vector<16x128xf32>
    %33 = arith.subf %29, %32 : vector<16x128xf32>
    %34 = math.exp %33 : vector<16x128xf32>
    %cst_22 = arith.constant dense<0.000000e+00> : vector<16xf32>
    %35 = vector.multi_reduction <add>, %34, %cst_22 [1] : vector<16x128xf32> to vector<16xf32>
    %36 = vector.shape_cast %35 : vector<16xf32> to vector<16x1xf32>
    %37 = math.log %36 : vector<16x1xf32>
    %38 = vector.broadcast %37 : vector<16x1xf32> to vector<16x128xf32>
    %39 = arith.subf %33, %38 : vector<16x128xf32>
    %c0_23 = arith.constant 0 : index
    %c0_24 = arith.constant 0 : index
    %40 = vector.load %arg8[%c0_23, %c0_24] : memref<16x128xf32, #tpu.memory_space<vmem>>, vector<16x128xf32>
    tpu.vector_store %arg8[%c0_23, %c0_24], %39 {strides = array<i32>} : memref<16x128xf32, #tpu.memory_space<vmem>>, vector<16x128xf32>,
    return
  }
  func.func @transform_0(%arg0: i32) -> (i32, i32) {
    %c0_i32 = arith.constant 0 : i32
    %c0_i32_0 = arith.constant 0 : i32
    %c0_i32_1 = arith.constant 0 : i32
    return %c0_i32, %c0_i32_0 : i32, i32
  }
  func.func @transform_1(%arg0: i32) -> (i32, i32) {
    %c0_i32 = arith.constant 0 : i32
    %c0_i32_0 = arith.constant 0 : i32
    %c0_i32_1 = arith.constant 0 : i32
    return %c0_i32, %c0_i32_0 : i32, i32
  }
  func.func @transform_2(%arg0: i32) -> (i32, i32) {
    %c0_i32 = arith.constant 0 : i32
    %c0_i32_0 = arith.constant 0 : i32
    %c0_i32_1 = arith.constant 0 : i32
    return %c0_i32, %c0_i32_0 : i32, i32
  }
  func.func @transform_3(%arg0: i32) -> (i32, i32) {
    %c0_i32 = arith.constant 0 : i32
    %c0_i32_0 = arith.constant 0 : i32
    %c0_i32_1 = arith.constant 0 : i32
    return %c0_i32, %c0_i32_0 : i32, i32
  }
  func.func @transform_4(%arg0: i32) -> (i32, i32) {
    %c0_i32 = arith.constant 0 : i32
    %c0_i32_0 = arith.constant 0 : i32
    %c0_i32_1 = arith.constant 0 : i32
    return %c0_i32, %c0_i32_0 : i32, i32
  }
  func.func @transform_5(%arg0: i32) -> (i32, i32) {
    %c0_i32 = arith.constant 0 : i32
    %c0_i32_0 = arith.constant 0 : i32
    %c0_i32_1 = arith.constant 0 : i32
    return %c0_i32, %c0_i32_0 : i32, i32
  }
  func.func @transform_6(%arg0: i32) -> (i32, i32) {
    %c0_i32 = arith.constant 0 : i32
    %c0_i32_0 = arith.constant 0 : i32
    %c0_i32_1 = arith.constant 0 : i32
    return %c0_i32, %c0_i32_0 : i32, i32
  }
  func.func @transform_7(%arg0: i32) -> (i32, i32) {
    %c0_i32 = arith.constant 0 : i32
    %c0_i32_0 = arith.constant 0 : i32
    %c0_i32_1 = arith.constant 0 : i32
    return %c0_i32, %c0_i32_0 : i32, i32
  }
}

</mosaic_0001>

<llo_original>
// kernel: tpu_custom_call.1
$region0: #{tpu_custom_call.1}
  #allocation0 [shape = 'u32[]', space=smem, size = 0x4, offset = 0x4, fixed_abs, tag = 'smem constant byte address 0x4 - core index']
  #allocation1 [shape = 'u32[144,128]{1,0:T(1,128)}', space=vmem, size = 0x12000, scoped, tag = 'internal scratch']
  %s0 = inlined_call_operand.hbm [shape: bf16[16,128], index: 0, kind: input, shape index: {}]
  %s1 = inlined_call_operand.hbm [shape: bf16[128,128], index: 1, kind: input, shape index: {}]
  %s2 = inlined_call_operand.hbm [shape: bf16[16,16], index: 2, kind: input, shape index: {}]
  %s3 = inlined_call_operand.vmem [shape: bf16[16,16], index: 3, kind: input, shape index: {}]
  %s4 = inlined_call_operand.hbm [shape: bf16[128,128], index: 4, kind: input, shape index: {}]
  %s5 = inlined_call_operand.hbm [shape: bf16[128,128], index: 5, kind: input, shape index: {}]
  %s6 = inlined_call_operand.vmem [shape: f32[8,128], index: 6, kind: input, shape index: {}]
  %s7 = inlined_call_operand.hbm [shape: f32[16,128], index: 7, kind: output, shape index: {}]
  %s8 = sld [smem:[#allocation0]]
  $region58: #{tpu_custom_call.1} parent=0
    _
  %s10 = ssub.s32 1, %s8
  %s11 = scalar_select 0, %s10, %s8
  $region1: #{tpu_custom_call.1} parent=0
    #allocation2 [shape = 'u8[4096]{0}', space=vmem, size = 0x1000, scoped, tag = 'input window, operand 0, single buffered']
    #allocation3 [shape = 's32[1]{0}', space=sflag, size = 0x4, scoped, tag = 'scoped memory for tpu_custom_call.1']
    #allocation4 [shape = 's32[1]{0}', space=sflag, size = 0x4, scoped, tag = 'scoped memory for tpu_custom_call.1']
    #allocation5 [shape = 'u8[32768]{0}', space=vmem, size = 0x8000, scoped, tag = 'input window, operand 1, single buffered']
    #allocation6 [shape = 's32[1]{0}', space=sflag, size = 0x4, scoped, tag = 'scoped memory for tpu_custom_call.1']
    #allocation7 [shape = 'u8[4096]{0}', space=vmem, size = 0x1000, scoped, tag = 'input window, operand 2, single buffered']
    #allocation8 [shape = 'u8[32768]{0}', space=vmem, size = 0x8000, scoped, tag = 'input window, operand 4, single buffered']
    #allocation9 [shape = 's32[1]{0}', space=sflag, size = 0x4, scoped, tag = 'scoped memory for tpu_custom_call.1']
    #allocation10 [shape = 'u8[32768]{0}', space=vmem, size = 0x8000, scoped, tag = 'input window, operand 5, single buffered']
    #allocation11 [shape = 'u8[8192]{0}', space=vmem, size = 0x2000, scoped, tag = 'output window, operand 0, single buffered']
    %12 = vsyncpa [#allocation3], 0
    %13 = vsyncpa [#allocation6], 0
    %14 = vsyncpa [#allocation9], 0
    %15 = vsyncpa [#allocation4], 0
    // Predicated region
    $region2: #{tpu_custom_call.1} parent=1 // pred_check
      _
    $region3: #{tpu_custom_call.1} parent=1 // pred_check_branch
      %17 = sbr.rel (0) target = $region5
    $region4: #{tpu_custom_call.1} parent=1 // pred_region
      %s19 = ssub.s32 128, 128
      %20 = vsyncadd [#allocation3], %s19
      %s21 = sshll.u32 [#allocation2], 4
      %s22 = int_to_ptr.vmem [resolvable:$true] %s21
      %27 = dma.hbm_to_vmem [thread:$0]  %s0, 128, %s22, [#allocation3], 64, 64, 4
    $region5: #{tpu_custom_call.1} parent=1 // pred_fallthru
      _
    // Predicated region
    $region6: #{tpu_custom_call.1} parent=1 // pred_check
      _
    $region7: #{tpu_custom_call.1} parent=1 // pred_check_branch
      %29 = sbr.rel (0) target = $region9
    $region8: #{tpu_custom_call.1} parent=1 // pred_region
      %s31 = ssub.s32 1024, 1024
      %32 = vsyncadd [#allocation6], %s31
      %s33 = sshll.u32 [#allocation5], 4
      %s34 = int_to_ptr.vmem [resolvable:$true] %s33
      %39 = dma.hbm_to_vmem [thread:$0]  %s1, 1024, %s34, [#allocation6], 64, 64, 4
    $region9: #{tpu_custom_call.1} parent=1 // pred_fallthru
      _
    // Predicated region
    $region10: #{tpu_custom_call.1} parent=1 // pred_check
      _
    $region11: #{tpu_custom_call.1} parent=1 // pred_check_branch
      %41 = sbr.rel (0) target = $region13
    $region12: #{tpu_custom_call.1} parent=1 // pred_region
      %s43 = ssub.s32 128, 128
      %44 = vsyncadd [#allocation6], %s43
      %s45 = sshll.u32 [#allocation7], 4
      %s46 = int_to_ptr.vmem [resolvable:$true] %s45
      %51 = dma.hbm_to_vmem [thread:$0]  %s2, 128, %s46, [#allocation6], 64, 64, 4
    $region13: #{tpu_custom_call.1} parent=1 // pred_fallthru
      _
    // Predicated region
    $region14: #{tpu_custom_call.1} parent=1 // pred_check
      _
    $region15: #{tpu_custom_call.1} parent=1 // pred_check_branch
      %53 = sbr.rel (0) target = $region17
    $region16: #{tpu_custom_call.1} parent=1 // pred_region
      _
    $region17: #{tpu_custom_call.1} parent=1 // pred_fallthru
      _
    // Predicated region
    $region18: #{tpu_custom_call.1} parent=1 // pred_check
      _
    $region19: #{tpu_custom_call.1} parent=1 // pred_check_branch
      %55 = sbr.rel (0) target = $region21
    $region20: #{tpu_custom_call.1} parent=1 // pred_region
      %s57 = ssub.s32 1024, 1024
      %58 = vsyncadd [#allocation9], %s57
      %s59 = sshll.u32 [#allocation8], 4
      %s60 = int_to_ptr.vmem [resolvable:$true] %s59
      %65 = dma.hbm_to_vmem [thread:$0]  %s4, 1024, %s60, [#allocation9], 64, 64, 4
    $region21: #{tpu_custom_call.1} parent=1 // pred_fallthru
      _
    // Predicated region
    $region22: #{tpu_custom_call.1} parent=1 // pred_check
      _
    $region23: #{tpu_custom_call.1} parent=1 // pred_check_branch
      %67 = sbr.rel (0) target = $region25
    $region24: #{tpu_custom_call.1} parent=1 // pred_region
      %s69 = ssub.s32 1024, 1024
      %70 = vsyncadd [#allocation9], %s69
      %s71 = sshll.u32 [#allocation10], 4
      %s72 = int_to_ptr.vmem [resolvable:$true] %s71
      %77 = dma.hbm_to_vmem [thread:$0]  %s5, 1024, %s72, [#allocation9], 64, 64, 4
    $region25: #{tpu_custom_call.1} parent=1 // pred_fallthru
      _
    // Predicated region
    $region26: #{tpu_custom_call.1} parent=1 // pred_check
      _
    $region27: #{tpu_custom_call.1} parent=1 // pred_check_branch
      %79 = sbr.rel (0) target = $region29
    $region28: #{tpu_custom_call.1} parent=1 // pred_region
      _
    $region29: #{tpu_custom_call.1} parent=1 // pred_fallthru
      _
    // Predicated region
    $region30: #{tpu_custom_call.1} parent=1 // pred_check
      _
    $region31: #{tpu_custom_call.1} parent=1 // pred_check_branch
      %81 = sbr.rel (0) target = $region33
    $region32: #{tpu_custom_call.1} parent=1 // pred_region
      %82 = dma.done [#allocation3], 128
    $region33: #{tpu_custom_call.1} parent=1 // pred_fallthru
      _
    // Predicated region
    $region34: #{tpu_custom_call.1} parent=1 // pred_check
      _
    $region35: #{tpu_custom_call.1} parent=1 // pred_check_branch
      %84 = sbr.rel (0) target = $region37
    $region36: #{tpu_custom_call.1} parent=1 // pred_region
      %85 = dma.done [#allocation6], 1024
    $region37: #{tpu_custom_call.1} parent=1 // pred_fallthru
      _
    // Predicated region
    $region38: #{tpu_custom_call.1} parent=1 // pred_check
      _
    $region39: #{tpu_custom_call.1} parent=1 // pred_check_branch
      %87 = sbr.rel (0) target = $region41
    $region40: #{tpu_custom_call.1} parent=1 // pred_region
      %88 = dma.done [#allocation6], 128
    $region41: #{tpu_custom_call.1} parent=1 // pred_fallthru
      _
    // Predicated region
    $region42: #{tpu_custom_call.1} parent=1 // pred_check
      _
    $region43: #{tpu_custom_call.1} parent=1 // pred_check_branch
      %90 = sbr.rel (0) target = $region45
    $region44: #{tpu_custom_call.1} parent=1 // pred_region
      %91 = dma.done [#allocation9], 1024
    $region45: #{tpu_custom_call.1} parent=1 // pred_fallthru
      _
    // Predicated region
    $region46: #{tpu_custom_call.1} parent=1 // pred_check
      _
    $region47: #{tpu_custom_call.1} parent=1 // pred_check_branch
      %93 = sbr.rel (0) target = $region49
    $region48: #{tpu_custom_call.1} parent=1 // pred_region
      %94 = dma.done [#allocation9], 1024
    $region49: #{tpu_custom_call.1} parent=1 // pred_fallthru
      _
    %v96 = vld [vmem:[#allocation2] sm:$0xf]
    %v97 = vld [vmem:[#allocation2 + $0x4] sm:$0xf]
    %v98 = vld [vmem:[#allocation5] sm:$0xf]
    %v99 = vld [vmem:[#allocation5 + $0x4] sm:$0xf]
    %v100 = vld [vmem:[#allocation5 + $0x8] sm:$0xf]
    %v101 = vld [vmem:[#allocation5 + $0xc] sm:$0xf]
    %v102 = vld [vmem:[#allocation5 + $0x10] sm:$0xf]
    %v103 = vld [vmem:[#allocation5 + $0x14] sm:$0xf]
    %v104 = vld [vmem:[#allocation5 + $0x18] sm:$0xf]
    %v105 = vld [vmem:[#allocation5 + $0x1c] sm:$0xf]
    %v106 = vld [vmem:[#allocation5 + $0x20] sm:$0xf]
    %v107 = vld [vmem:[#allocation5 + $0x24] sm:$0xf]
    %v108 = vld [vmem:[#allocation5 + $0x28] sm:$0xf]
    %v109 = vld [vmem:[#allocation5 + $0x2c] sm:$0xf]
    %v110 = vld [vmem:[#allocation5 + $0x30] sm:$0xf]
    %v111 = vld [vmem:[#allocation5 + $0x34] sm:$0xf]
    %v112 = vld [vmem:[#allocation5 + $0x38] sm:$0xf]
    %v113 = vld [vmem:[#allocation5 + $0x3c] sm:$0xf]
    %v116 = vunpack.c.l.b16 %v96
    %v117 = vunpack.c.l.b16 %v97
    %v118 = vpack.c.b16 %v117, %v116
    %v136 = vunpack.c.l.b16 %v98
    %v137 = vunpack.c.l.b16 %v99
    %v138 = vunpack.c.l.b16 %v100
    %v139 = vunpack.c.l.b16 %v101
    %v140 = vunpack.c.l.b16 %v102
    %v141 = vunpack.c.l.b16 %v103
    %v142 = vunpack.c.l.b16 %v104
    %v143 = vunpack.c.l.b16 %v105
    %v144 = vunpack.c.l.b16 %v106
    %v145 = vunpack.c.l.b16 %v107
    %v146 = vunpack.c.l.b16 %v108
    %v147 = vunpack.c.l.b16 %v109
    %v148 = vunpack.c.l.b16 %v110
    %v149 = vunpack.c.l.b16 %v111
    %v150 = vunpack.c.l.b16 %v112
    %v151 = vunpack.c.l.b16 %v113
    %v152 = vpack.c.b16 %v137, %v136
    %v153 = vpack.c.b16 %v139, %v138
    %v154 = vpack.c.b16 %v141, %v140
    %v155 = vpack.c.b16 %v143, %v142
    %v156 = vpack.c.b16 %v145, %v144
    %v157 = vpack.c.b16 %v147, %v146
    %v158 = vpack.c.b16 %v149, %v148
    %v159 = vpack.c.b16 %v151, %v150
    %168 = vmatprep.subr.bf16.mxu0 0
    %169 = vmatpush1.bf16.msra.mxu0 %v152
    %170 = vmatprep.subr.bf16.mxu0 0
    %171 = vmatpush1.bf16.msra.mxu0 %v153
    %172 = vmatprep.subr.bf16.mxu0 0
    %173 = vmatpush1.bf16.msra.mxu0 %v154
    %174 = vmatprep.subr.bf16.mxu0 0
    %175 = vmatpush1.bf16.msra.mxu0 %v155
    %176 = vmatprep.subr.bf16.mxu0 0
    %177 = vmatpush1.bf16.msra.mxu0 %v156
    %178 = vmatprep.subr.bf16.mxu0 0
    %179 = vmatpush1.bf16.msra.mxu0 %v157
    %180 = vmatprep.subr.bf16.mxu0 0
    %181 = vmatpush1.bf16.msra.mxu0 %v158
    %182 = vmatprep.subr.bf16.mxu0 0
    %183 = vmatpush1.bf16.msra.mxu0 %v159
    %184 = vmatprep.subr.bf16.mxu0 0
    %185 = vmatpush1.bf16.msra.mxu0 0
    %186 = vmatprep.subr.bf16.mxu0 0
    %187 = vmatpush1.bf16.msra.mxu0 0
    %188 = vmatprep.subr.bf16.mxu0 0
    %189 = vmatpush1.bf16.msra.mxu0 0
    %190 = vmatprep.subr.bf16.mxu0 0
    %191 = vmatpush1.bf16.msra.mxu0 0
    %192 = vmatprep.subr.bf16.mxu0 0
    %193 = vmatpush1.bf16.msra.mxu0 0
    %194 = vmatprep.subr.bf16.mxu0 0
    %195 = vmatpush1.bf16.msra.mxu0 0
    %196 = vmatprep.subr.bf16.mxu0 0
    %197 = vmatpush1.bf16.msra.mxu0 0
    %198 = vmatprep.subr.bf16.mxu0 0
    %199 = vmatpush1.bf16.msra.mxu0 0
    %200 = vmatprep.mubr.bf16.mxu0 0
    %201 = vmatmul.mubr.bf16.gmra.mrb[0].mxu0 %v118
    %v202 = vpop.f32.mrb[0].mxu0
    %v203 = vadd.f32 0.0, %v202
    %v204 = vpop.f32.mrb[0].mxu0
    %v205 = vpop.f32.mrb[0].mxu0
    %v206 = vadd.f32 0.0, %v205
    %v207 = vpop.f32.mrb[0].mxu0
    %208 = vdwg.mxu0
    %v209 = vmul.f32 %v203, 0.2
    %v210 = vmul.f32 %v206, 0.2
    %v211 = vld [vmem:[#allocation7] sm:$0xf]
    %v212 = vld [vmem:[#allocation7 + $0x4] sm:$0xf]
    %v213 = vpack.c.bf16 %v210, %v209
    %v216 = vunpack.c.l.b16 %v211
    %v217 = vunpack.c.l.b16 %v212
    %v218 = vpack.c.b16 %v217, %v216
    %vm219 = vcmask 130048
    %v221 = vsel %vm219, %v218, 0
    %223 = vmatprep.subr.bf16.mxu0 0
    %224 = vmatpush1.bf16.msra.mxu0 %v213
    %225 = vmatprep.subr.bf16.mxu0 0
    %226 = vmatpush1.bf16.msra.mxu0 0
    %227 = vmatprep.subr.bf16.mxu0 0
    %228 = vmatpush1.bf16.msra.mxu0 0
    %229 = vmatprep.subr.bf16.mxu0 0
    %230 = vmatpush1.bf16.msra.mxu0 0
    %231 = vmatprep.subr.bf16.mxu0 0
    %232 = vmatpush1.bf16.msra.mxu0 0
    %233 = vmatprep.subr.bf16.mxu0 0
    %234 = vmatpush1.bf16.msra.mxu0 0
    %235 = vmatprep.subr.bf16.mxu0 0
    %236 = vmatpush1.bf16.msra.mxu0 0
    %237 = vmatprep.subr.bf16.mxu0 0
    %238 = vmatpush1.bf16.msra.mxu0 0
    %239 = vmatprep.subr.bf16.mxu0 0
    %240 = vmatpush1.bf16.msra.mxu0 0
    %241 = vmatprep.subr.bf16.mxu0 0
    %242 = vmatpush1.bf16.msra.mxu0 0
    %243 = vmatprep.subr.bf16.mxu0 0
    %244 = vmatpush1.bf16.msra.mxu0 0
    %245 = vmatprep.subr.bf16.mxu0 0
    %246 = vmatpush1.bf16.msra.mxu0 0
    %247 = vmatprep.subr.bf16.mxu0 0
    %248 = vmatpush1.bf16.msra.mxu0 0
    %249 = vmatprep.subr.bf16.mxu0 0
    %250 = vmatpush1.bf16.msra.mxu0 0
    %251 = vmatprep.subr.bf16.mxu0 0
    %252 = vmatpush1.bf16.msra.mxu0 0
    %253 = vmatprep.subr.bf16.mxu0 0
    %254 = vmatpush1.bf16.msra.mxu0 0
    %255 = vmatprep.mubr.bf16.mxu0 0
    %256 = vmatmul.mubr.bf16.gmra.mrb[0].mxu0 %v221
    %v257 = vpop.f32.mrb[0].mxu0
    %v258 = vadd.f32 0.0, %v257
    %v259 = vpop.f32.mrb[0].mxu0
    %v260 = vpop.f32.mrb[0].mxu0
    %v261 = vadd.f32 0.0, %v260
    %v262 = vpop.f32.mrb[0].mxu0
    %263 = vdwg.mxu0
    %v264 = vpack.c.bf16 %v261, %v258
    %v265 = vld [vmem:[#allocation8] sm:$0xf]
    %v266 = vld [vmem:[#allocation8 + $0x4] sm:$0xf]
    %v267 = vld [vmem:[#allocation8 + $0x8] sm:$0xf]
    %v268 = vld [vmem:[#allocation8 + $0xc] sm:$0xf]
    %v269 = vld [vmem:[#allocation8 + $0x10] sm:$0xf]
    %v270 = vld [vmem:[#allocation8 + $0x14] sm:$0xf]
    %v271 = vld [vmem:[#allocation8 + $0x18] sm:$0xf]
    %v272 = vld [vmem:[#allocation8 + $0x1c] sm:$0xf]
    %v273 = vld [vmem:[#allocation8 + $0x20] sm:$0xf]
    %v274 = vld [vmem:[#allocation8 + $0x24] sm:$0xf]
    %v275 = vld [vmem:[#allocation8 + $0x28] sm:$0xf]
    %v276 = vld [vmem:[#allocation8 + $0x2c] sm:$0xf]
    %v277 = vld [vmem:[#allocation8 + $0x30] sm:$0xf]
    %v278 = vld [vmem:[#allocation8 + $0x34] sm:$0xf]
    %v279 = vld [vmem:[#allocation8 + $0x38] sm:$0xf]
    %v280 = vld [vmem:[#allocation8 + $0x3c] sm:$0xf]
    %v281 = vld [vmem:[%s6] sm:$0x1]
    %v282 = vlaneseq
    %v283 = vshrl.u32 %v282, 7
    %v284 = vsub.s32 0, %v283
    %v285 = vrot.slane %v281, %v284
    %v302 = vunpack.c.l.b16 %v265
    %v303 = vunpack.c.l.b16 %v266
    %v304 = vunpack.c.l.b16 %v267
    %v305 = vunpack.c.l.b16 %v268
    %v306 = vunpack.c.l.b16 %v269
    %v307 = vunpack.c.l.b16 %v270
    %v308 = vunpack.c.l.b16 %v271
    %v309 = vunpack.c.l.b16 %v272
    %v310 = vunpack.c.l.b16 %v273
    %v311 = vunpack.c.l.b16 %v274
    %v312 = vunpack.c.l.b16 %v275
    %v313 = vunpack.c.l.b16 %v276
    %v314 = vunpack.c.l.b16 %v277
    %v315 = vunpack.c.l.b16 %v278
    %v316 = vunpack.c.l.b16 %v279
    %v317 = vunpack.c.l.b16 %v280
    %v318 = vpack.c.b16 %v303, %v302
    %v319 = vpack.c.b16 %v305, %v304
    %v320 = vpack.c.b16 %v307, %v306
    %v321 = vpack.c.b16 %v309, %v308
    %v322 = vpack.c.b16 %v311, %v310
    %v323 = vpack.c.b16 %v313, %v312
    %v324 = vpack.c.b16 %v315, %v314
    %v325 = vpack.c.b16 %v317, %v316
    %334 = vmatprep.subr.bf16.mxu0 0
    %335 = vmatpush1.bf16.msra.mxu0 %v318
    %336 = vmatprep.subr.bf16.mxu0 0
    %337 = vmatpush1.bf16.msra.mxu0 %v319
    %338 = vmatprep.subr.bf16.mxu0 0
    %339 = vmatpush1.bf16.msra.mxu0 %v320
    %340 = vmatprep.subr.bf16.mxu0 0
    %341 = vmatpush1.bf16.msra.mxu0 %v321
    %342 = vmatprep.subr.bf16.mxu0 0
    %343 = vmatpush1.bf16.msra.mxu0 %v322
    %344 = vmatprep.subr.bf16.mxu0 0
    %345 = vmatpush1.bf16.msra.mxu0 %v323
    %346 = vmatprep.subr.bf16.mxu0 0
    %347 = vmatpush1.bf16.msra.mxu0 %v324
    %348 = vmatprep.subr.bf16.mxu0 0
    %349 = vmatpush1.bf16.msra.mxu0 %v325
    %350 = vmatprep.subr.bf16.mxu0 0
    %351 = vmatpush1.bf16.msra.mxu0 0
    %352 = vmatprep.subr.bf16.mxu0 0
    %353 = vmatpush1.bf16.msra.mxu0 0
    %354 = vmatprep.subr.bf16.mxu0 0
    %355 = vmatpush1.bf16.msra.mxu0 0
    %356 = vmatprep.subr.bf16.mxu0 0
    %357 = vmatpush1.bf16.msra.mxu0 0
    %358 = vmatprep.subr.bf16.mxu0 0
    %359 = vmatpush1.bf16.msra.mxu0 0
    %360 = vmatprep.subr.bf16.mxu0 0
    %361 = vmatpush1.bf16.msra.mxu0 0
    %362 = vmatprep.subr.bf16.mxu0 0
    %363 = vmatpush1.bf16.msra.mxu0 0
    %364 = vmatprep.subr.bf16.mxu0 0
    %365 = vmatpush1.bf16.msra.mxu0 0
    %366 = vmatprep.mubr.bf16.mxu0 0
    %367 = vmatmul.mubr.bf16.gmra.mrb[0].mxu0 %v264
    %v368 = vpop.f32.mrb[0].mxu0
    %v369 = vadd.f32 %v285, %v368
    %v370 = vpop.f32.mrb[0].mxu0
    %v371 = vpop.f32.mrb[0].mxu0
    %v372 = vadd.f32 %v285, %v371
    %v373 = vpop.f32.mrb[0].mxu0
    %374 = vdwg.mxu0
    %v375 = vmax.f32 %v369, 0.0
    %v376 = vmax.f32 %v372, 0.0
    %v377 = vpack.c.bf16 %v376, %v375
    %v378 = vld [vmem:[#allocation10] sm:$0xf]
    %v379 = vld [vmem:[#allocation10 + $0x4] sm:$0xf]
    %v380 = vld [vmem:[#allocation10 + $0x8] sm:$0xf]
    %v381 = vld [vmem:[#allocation10 + $0xc] sm:$0xf]
    %v382 = vld [vmem:[#allocation10 + $0x10] sm:$0xf]
    %v383 = vld [vmem:[#allocation10 + $0x14] sm:$0xf]
    %v384 = vld [vmem:[#allocation10 + $0x18] sm:$0xf]
    %v385 = vld [vmem:[#allocation10 + $0x1c] sm:$0xf]
    %v386 = vld [vmem:[#allocation10 + $0x20] sm:$0xf]
    %v387 = vld [vmem:[#allocation10 + $0x24] sm:$0xf]
    %v388 = vld [vmem:[#allocation10 + $0x28] sm:$0xf]
    %v389 = vld [vmem:[#allocation10 + $0x2c] sm:$0xf]
    %v390 = vld [vmem:[#allocation10 + $0x30] sm:$0xf]
    %v391 = vld [vmem:[#allocation10 + $0x34] sm:$0xf]
    %v392 = vld [vmem:[#allocation10 + $0x38] sm:$0xf]
    %v393 = vld [vmem:[#allocation10 + $0x3c] sm:$0xf]
    %v410 = vunpack.c.l.b16 %v378
    %v411 = vunpack.c.l.b16 %v379
    %v412 = vunpack.c.l.b16 %v380
    %v413 = vunpack.c.l.b16 %v381
    %v414 = vunpack.c.l.b16 %v382
    %v415 = vunpack.c.l.b16 %v383
    %v416 = vunpack.c.l.b16 %v384
    %v417 = vunpack.c.l.b16 %v385
    %v418 = vunpack.c.l.b16 %v386
    %v419 = vunpack.c.l.b16 %v387
    %v420 = vunpack.c.l.b16 %v388
    %v421 = vunpack.c.l.b16 %v389
    %v422 = vunpack.c.l.b16 %v390
    %v423 = vunpack.c.l.b16 %v391
    %v424 = vunpack.c.l.b16 %v392
    %v425 = vunpack.c.l.b16 %v393
    %v426 = vpack.c.b16 %v411, %v410
    %v427 = vpack.c.b16 %v413, %v412
    %v428 = vpack.c.b16 %v415, %v414
    %v429 = vpack.c.b16 %v417, %v416
    %v430 = vpack.c.b16 %v419, %v418
    %v431 = vpack.c.b16 %v421, %v420
    %v432 = vpack.c.b16 %v423, %v422
    %v433 = vpack.c.b16 %v425, %v424
    %442 = vmatprep.subr.bf16.mxu0 0
    %443 = vmatpush1.bf16.msra.mxu0 %v426
    %444 = vmatprep.subr.bf16.mxu0 0
    %445 = vmatpush1.bf16.msra.mxu0 %v427
    %446 = vmatprep.subr.bf16.mxu0 0
    %447 = vmatpush1.bf16.msra.mxu0 %v428
    %448 = vmatprep.subr.bf16.mxu0 0
    %449 = vmatpush1.bf16.msra.mxu0 %v429
    %450 = vmatprep.subr.bf16.mxu0 0
    %451 = vmatpush1.bf16.msra.mxu0 %v430
    %452 = vmatprep.subr.bf16.mxu0 0
    %453 = vmatpush1.bf16.msra.mxu0 %v431
    %454 = vmatprep.subr.bf16.mxu0 0
    %455 = vmatpush1.bf16.msra.mxu0 %v432
    %456 = vmatprep.subr.bf16.mxu0 0
    %457 = vmatpush1.bf16.msra.mxu0 %v433
    %458 = vmatprep.subr.bf16.mxu0 0
    %459 = vmatpush1.bf16.msra.mxu0 0
    %460 = vmatprep.subr.bf16.mxu0 0
    %461 = vmatpush1.bf16.msra.mxu0 0
    %462 = vmatprep.subr.bf16.mxu0 0
    %463 = vmatpush1.bf16.msra.mxu0 0
    %464 = vmatprep.subr.bf16.mxu0 0
    %465 = vmatpush1.bf16.msra.mxu0 0
    %466 = vmatprep.subr.bf16.mxu0 0
    %467 = vmatpush1.bf16.msra.mxu0 0
    %468 = vmatprep.subr.bf16.mxu0 0
    %469 = vmatpush1.bf16.msra.mxu0 0
    %470 = vmatprep.subr.bf16.mxu0 0
    %471 = vmatpush1.bf16.msra.mxu0 0
    %472 = vmatprep.subr.bf16.mxu0 0
    %473 = vmatpush1.bf16.msra.mxu0 0
    %474 = vmatprep.mubr.bf16.mxu0 0
    %475 = vmatmul.mubr.bf16.gmra.mrb[0].mxu0 %v377
    %v476 = vpop.f32.mrb[0].mxu0
    %v477 = vadd.f32 0.0, %v476
    %v478 = vpop.f32.mrb[0].mxu0
    %v479 = vpop.f32.mrb[0].mxu0
    %v480 = vadd.f32 0.0, %v479
    %v481 = vpop.f32.mrb[0].mxu0
    %482 = vdwg.mxu0
    %v483 = vld [vmem:[%s3] sm:$0xf]
    %v484 = vld [vmem:[%s3 + $0x4] sm:$0xf]
    %v485 = vpack.c.bf16 %v480, %v477
    %v486 = vld [vmem:[%s6 + $0x1] sm:$0x1]
    %v487 = vlaneseq
    %v488 = vshrl.u32 %v487, 7
    %v489 = vsub.s32 0, %v488
    %v490 = vrot.slane %v486, %v489
    %v493 = vunpack.c.l.b16 %v483
    %v494 = vunpack.c.l.b16 %v484
    %v495 = vpack.c.b16 %v494, %v493
    %v497 = vsel %vm219, %v495, 0
    %499 = vmatprep.subr.bf16.mxu0 0
    %500 = vmatpush1.bf16.msra.mxu0 %v485
    %501 = vmatprep.subr.bf16.mxu0 0
    %502 = vmatpush1.bf16.msra.mxu0 0
    %503 = vmatprep.subr.bf16.mxu0 0
    %504 = vmatpush1.bf16.msra.mxu0 0
    %505 = vmatprep.subr.bf16.mxu0 0
    %506 = vmatpush1.bf16.msra.mxu0 0
    %507 = vmatprep.subr.bf16.mxu0 0
    %508 = vmatpush1.bf16.msra.mxu0 0
    %509 = vmatprep.subr.bf16.mxu0 0
    %510 = vmatpush1.bf16.msra.mxu0 0
    %511 = vmatprep.subr.bf16.mxu0 0
    %512 = vmatpush1.bf16.msra.mxu0 0
    %513 = vmatprep.subr.bf16.mxu0 0
    %514 = vmatpush1.bf16.msra.mxu0 0
    %515 = vmatprep.subr.bf16.mxu0 0
    %516 = vmatpush1.bf16.msra.mxu0 0
    %517 = vmatprep.subr.bf16.mxu0 0
    %518 = vmatpush1.bf16.msra.mxu0 0
    %519 = vmatprep.subr.bf16.mxu0 0
    %520 = vmatpush1.bf16.msra.mxu0 0
    %521 = vmatprep.subr.bf16.mxu0 0
    %522 = vmatpush1.bf16.msra.mxu0 0
    %523 = vmatprep.subr.bf16.mxu0 0
    %524 = vmatpush1.bf16.msra.mxu0 0
    %525 = vmatprep.subr.bf16.mxu0 0
    %526 = vmatpush1.bf16.msra.mxu0 0
    %527 = vmatprep.subr.bf16.mxu0 0
    %528 = vmatpush1.bf16.msra.mxu0 0
    %529 = vmatprep.subr.bf16.mxu0 0
    %530 = vmatpush1.bf16.msra.mxu0 0
    %531 = vmatprep.mubr.bf16.mxu0 0
    %532 = vmatmul.mubr.bf16.gmra.mrb[0].mxu0 %v497
    %v533 = vpop.f32.mrb[0].mxu0
    %v534 = vadd.f32 %v490, %v533
    %v535 = vpop.f32.mrb[0].mxu0
    %v536 = vpop.f32.mrb[0].mxu0
    %v537 = vadd.f32 %v490, %v536
    %v538 = vpop.f32.mrb[0].mxu0
    %539 = vdwg.mxu0
    %v540 = vlaneseq
    %v541 = vand.u32 %v540, 127
    %vm542 = vcmp.lt.s32.totalorder %v541, 8
    %v543 = vsel %vm542, %v534, -1e+30
    %v544 = vsel %vm542, %v537, -1e+30
    %545 = vmax.xlane.f32.xlu0 %v543
    %v546 = vpop.xlane.xlu0 %545
    %547 = vmax.xlane.f32.xlu0 %v544
    %v548 = vpop.xlane.xlu0 %547
    %v549 = vsub.f32 %v543, %v546
    %v550 = vsub.f32 %v544, %v548
    %v551 = vmul.f32 %v549, 1.442695
    %v552 = vpow.pop %v551
    %v553 = vmul.f32 %v550, 1.442695
    %v554 = vpow.pop %v553
    %555 = vadd.xlane.f32.xlu0 %v552
    %v556 = vpop.xlane.xlu0 %555
    %557 = vadd.xlane.f32.xlu0 %v554
    %v558 = vpop.xlane.xlu0 %557
    %v559 = vlog2.pop %v556
    %v560 = vmul.f32 %v559, 0.6931472
    %v561 = vlog2.pop %v558
    %v562 = vmul.f32 %v561, 0.6931472
    %v563 = vsub.f32 %v549, %v560
    %v564 = vsub.f32 %v550, %v562
    %565 = vst [vmem:[#allocation11] sm:$0xff] %v563
    %566 = vst [vmem:[#allocation11 + $0x8] sm:$0xff] %v564
    // Predicated region
    $region50: #{tpu_custom_call.1} parent=1 // pred_check
      _
    $region51: #{tpu_custom_call.1} parent=1 // pred_check_branch
      %568 = sbr.rel (0) target = $region53
    $region52: #{tpu_custom_call.1} parent=1 // pred_region
      %s570 = ssub.s32 256, 256
      %571 = vsyncadd [#allocation4], %s570
      %s572 = sshll.u32 [#allocation11], 4
      %s573 = int_to_ptr.vmem [resolvable:$true] %s572
      %578 = dma.vmem_to_hbm [thread:$0]  %s573, 256, %s7, [#allocation4], 128, 128, 8
    $region53: #{tpu_custom_call.1} parent=1 // pred_fallthru
      _
    // Predicated region
    $region54: #{tpu_custom_call.1} parent=1 // pred_check
      _
    $region55: #{tpu_custom_call.1} parent=1 // pred_check_branch
      %580 = sbr.rel (0) target = $region57
    $region56: #{tpu_custom_call.1} parent=1 // pred_region
      %581 = dma.done [#allocation4], 256
    $region57: #{tpu_custom_call.1} parent=1 // pred_fallthru
      _
    %582 = vsyncpa [#allocation3], 1
    %583 = vsyncpa [#allocation6], 1
    %584 = vsyncpa [#allocation9], 1
    %585 = vsyncpa [#allocation4], 1

</llo_original>
